<compile_context>
chip_gen: v6e
topology: v6e:2x2x1
jax: 0.10.0
libtpu: 0.0.40
codegen_flags: <defaults>
</compile_context>

<pallas_src>
import functools

import jax
import jax.numpy as jnp
import numpy as np
from jax import lax
from jax.experimental import pallas as pl
from jax.experimental.pallas import tpu as pltpu


def _round_up(a, b):
    return ((a + b - 1) // b) * b


def _hw_budget():
    """Per-generation sizing: (max elements per input block, vmem_limit_bytes)."""
    cap = None
    try:
        cap = getattr(pltpu.get_tpu_info(), "vmem_capacity_bytes", None)
    except Exception:
        cap = None
    if cap is not None and cap >= 96 * 1024 * 1024:
        # v5e / v6e: 128 MiB physical VMEM -> ~4 MiB f32 input blocks.
        return 1024 * 1024, 64 * 1024 * 1024
    # v7x (64 MiB VMEM) or unknown: conservative.  2 inputs x 2 pipeline
    # buffers plus several full-tile f32 temporaries must fit with headroom.
    return 512 * 1024, 40 * 1024 * 1024


def _choose_tile_n(n, c, max_block_elems):
    tile = max_block_elems // max(c, 1)
    tile = max(8, min(tile, 8192))
    # Keep >= ~4 grid steps when the batch allows it so the ("parallel",) grid
    # axis can shard across v7x's two TensorCores.  Extra steps cost ~0.35us
    # each on single-TC chips -> negligible.
    if n >= 32:
        tile = min(tile, _round_up((n + 3) // 4, 8))
    elif n >= 16:
        tile = min(tile, _round_up((n + 1) // 2, 8))
    # Never make the block taller than the (8-aligned) batch itself.
    tile = min(tile, _round_up(n, 8))
    return max(8, (tile // 8) * 8)


def _row_loss_kernel(x_ref, y_ref, o_ref, *, n_rows):
    """Per-row normalized soft-target CE. x/y blocks are (TN, C); out (TN, 1)."""
    x = x_ref[...].astype(jnp.float32)                                # (TN, C)
    y = y_ref[...].astype(jnp.float32)                                # (TN, C)
    tn, c = x.shape

    m = jnp.max(x, axis=-1, keepdims=True)                            # (TN, 1)
    e = jnp.exp(x - m)                                                # (TN, C)
    lse = jnp.log(jnp.sum(e, axis=-1, keepdims=True)) + m             # full LSE

    sum_x = jnp.sum(x, axis=-1, keepdims=True)                        # (TN, 1)
    sum_y = jnp.sum(y, axis=-1, keepdims=True)                        # (TN, 1)
    sum_yx = jnp.sum(y * x, axis=-1, keepdims=True)                   # (TN, 1)

    # pred = x - lse ;  num = -sum(y*pred) ;  den = -sum(pred)
    num = lse * sum_y - sum_yx
    den = jnp.float32(c) * lse - sum_x
    loss = num / den                                                  # (TN, 1)

    # Ragged last tile: rows past n_rows read undefined data; zero them so the
    # store path (and anything downstream) never sees NaN/Inf.  Their output
    # rows are out-of-bounds and dropped by Pallas regardless.
    row = pl.program_id(0) * tn + lax.broadcasted_iota(jnp.int32, (tn, 1), 0)
    loss = jnp.where(row < n_rows, loss, 0.0)
    o_ref[...] = loss.astype(o_ref.dtype)


def normalized_soft_target_cross_entropy(x, y, reduction="mean"):
    """x: (..., C) logits, y: (..., C) soft targets.

    Returns a scalar ('mean') or a (...,)-shaped per-row loss ('none'), in f32.
    """
    assert x.shape == y.shape and x.ndim >= 1
    lead_shape = x.shape[:-1]
    c = x.shape[-1]
    x2 = x.reshape(-1, c)
    y2 = y.reshape(-1, c)
    n = x2.shape[0]

    max_block_elems, vmem_limit = _hw_budget()
    tile_n = _choose_tile_n(n, c, max_block_elems)
    grid = (pl.cdiv(n, tile_n),)

    kernel = functools.partial(_row_loss_kernel, n_rows=n)

    per_row = pl.pallas_call(
        kernel,
        out_shape=jax.ShapeDtypeStruct((n, 1), jnp.float32),
        grid_spec=pltpu.PrefetchScalarGridSpec(
            num_scalar_prefetch=0,
            grid=grid,
            in_specs=[
                # Block last dim == full array dim C (legal even if C % 128 != 0);
                # row dim is a multiple of 8.  Ragged last block handled in-kernel.
                pl.BlockSpec((tile_n, c), lambda i: (i, 0)),
                pl.BlockSpec((tile_n, c), lambda i: (i, 0)),
            ],
            out_specs=pl.BlockSpec((tile_n, 1), lambda i: (i, 0)),
        ),
        compiler_params=pltpu.CompilerParams(
            dimension_semantics=("parallel",),
            vmem_limit_bytes=vmem_limit,
        ),
    )(x2, y2)[:, 0]

    if reduction == "none":
        return per_row.reshape(lead_shape)
    elif reduction == "mean":
        # Output has exactly n rows (OOB writes from the ragged tile are
        # dropped), so sum / n is exact.
        return jnp.sum(per_row) / jnp.float32(n)
    else:
        raise NotImplementedError


def _reference(x, y, reduction="mean"):
    pred = jax.nn.log_softmax(x.astype(jnp.float32), axis=-1)
    loss = -jnp.sum(y.astype(jnp.float32) * pred, axis=-1) / -jnp.sum(pred, axis=-1)
    return jnp.mean(loss) if reduction == "mean" else loss


def _check(x, y, rtol=1e-4, atol=1e-6):
    got_mean = jax.block_until_ready(
        normalized_soft_target_cross_entropy(x, y, reduction="mean"))
    got_none = jax.block_until_ready(
        normalized_soft_target_cross_entropy(x, y, reduction="none"))
    np.testing.assert_allclose(np.asarray(got_mean),
                               np.asarray(_reference(x, y, "mean")),
                               rtol=rtol, atol=atol)
    np.testing.assert_allclose(np.asarray(got_none),
                               np.asarray(_reference(x, y, "none")),
                               rtol=rtol, atol=atol)


if __name__ == "__main__":
    key = jax.random.PRNGKey(0)
    k1, k2, k3, k4, k5, k6, k7, k8 = jax.random.split(key, 8)

    # 1) lane-aligned case: batch=8, classes=128.
    x1 = jax.random.normal(k1, (8, 128), dtype=jnp.float32)
    y1 = jax.nn.softmax(2.0 * jax.random.normal(k2, (8, 128), jnp.float32), axis=-1)
    _check(x1, y1)

    # 2) 3-D input, unaligned C and N (N=10 < one 8-aligned block, C=100):
    #    exercises the no-pad path and the in-kernel row mask.
    x2 = jax.random.normal(k3, (2, 5, 100), dtype=jnp.float32)
    y2 = jax.nn.softmax(2.0 * jax.random.normal(k4, (2, 5, 100), jnp.float32), axis=-1)
    _check(x2, y2)

    # 3) multi-step grid with a ragged last row-tile (N=50, C=96):
    #    tile_n is capped for >=4 parallel steps; last tile is partially valid.
    x3 = jax.random.normal(k5, (50, 96), dtype=jnp.float32)
    y3 = jax.nn.softmax(2.0 * jax.random.normal(k6, (50, 96), jnp.float32), axis=-1)
    _check(x3, y3)

    # 4) bf16 logits/targets fed natively (halved HBM reads), f32 math inside.
    x4 = jax.random.normal(k7, (16, 384), jnp.float32).astype(jnp.bfloat16)
    y4 = jax.nn.softmax(2.0 * jax.random.normal(k8, (16, 384), jnp.float32),
                        axis=-1).astype(jnp.bfloat16)
    _check(x4, y4)

    print("KERNEL_OK")
</pallas_src>

<mosaic_0001>
module attributes {stable_mosaic.version = 11 : i64} {
  func.func @_row_loss_kernel(%arg0: i32, %arg1: memref<8x128xf32, #tpu.memory_space<vmem>>, %arg2: memref<8x128xf32, #tpu.memory_space<vmem>>, %arg3: memref<8x1xf32, #tpu.memory_space<vmem>>) attributes {dimension_semantics = [#tpu.dimension_semantics<parallel>], iteration_bounds = array<i64: 1>, scalar_prefetch = 0 : i64, scratch_operands = 0 : i64, tpu.core_type = #tpu.core_type<tc>, window_params = [{transform_indices = @transform_0, window_bounds = array<i64: 8, 128>}, {transform_indices = @transform_1, window_bounds = array<i64: 8, 128>}, {transform_indices = @transform_2, window_bounds = array<i64: 8, 1>}]} {
    %c0 = arith.constant 0 : index
    %c0_0 = arith.constant 0 : index
    %0 = vector.load %arg1[%c0, %c0_0] : memref<8x128xf32, #tpu.memory_space<vmem>>, vector<8x128xf32>
    %c0_1 = arith.constant 0 : index
    %c0_2 = arith.constant 0 : index
    %1 = vector.load %arg2[%c0_1, %c0_2] : memref<8x128xf32, #tpu.memory_space<vmem>>, vector<8x128xf32>
    %cst = arith.constant dense<0xFF800000> : vector<8xf32>
    %2 = vector.multi_reduction <maximumf>, %0, %cst [1] : vector<8x128xf32> to vector<8xf32>
    %3 = vector.shape_cast %2 : vector<8xf32> to vector<8x1xf32>
    %4 = vector.broadcast %3 : vector<8x1xf32> to vector<8x128xf32>
    %5 = arith.subf %0, %4 : vector<8x128xf32>
    %6 = math.exp %5 : vector<8x128xf32>
    %cst_3 = arith.constant dense<0.000000e+00> : vector<8xf32>
    %7 = vector.multi_reduction <add>, %6, %cst_3 [1] : vector<8x128xf32> to vector<8xf32>
    %8 = vector.shape_cast %7 : vector<8xf32> to vector<8x1xf32>
    %9 = math.log %8 : vector<8x1xf32>
    %10 = arith.addf %9, %3 : vector<8x1xf32>
    %cst_4 = arith.constant dense<0.000000e+00> : vector<8xf32>
    %11 = vector.multi_reduction <add>, %0, %cst_4 [1] : vector<8x128xf32> to vector<8xf32>
    %12 = vector.shape_cast %11 : vector<8xf32> to vector<8x1xf32>
    %cst_5 = arith.constant dense<0.000000e+00> : vector<8xf32>
    %13 = vector.multi_reduction <add>, %1, %cst_5 [1] : vector<8x128xf32> to vector<8xf32>
    %14 = vector.shape_cast %13 : vector<8xf32> to vector<8x1xf32>
    %15 = arith.mulf %1, %0 : vector<8x128xf32>
    %cst_6 = arith.constant dense<0.000000e+00> : vector<8xf32>
    %16 = vector.multi_reduction <add>, %15, %cst_6 [1] : vector<8x128xf32> to vector<8xf32>
    %17 = vector.shape_cast %16 : vector<8xf32> to vector<8x1xf32>
    %18 = arith.mulf %10, %14 : vector<8x1xf32>
    %19 = arith.subf %18, %17 : vector<8x1xf32>
    %cst_7 = arith.constant 1.280000e+02 : f32
    %20 = vector.broadcast %cst_7 : f32 to vector<8x1xf32>
    %21 = arith.mulf %20, %10 : vector<8x1xf32>
    %22 = arith.subf %21, %12 : vector<8x1xf32>
    %23 = arith.divf %19, %22 : vector<8x1xf32>
    %c8_i32 = arith.constant 8 : i32
    %24 = arith.muli %arg0, %c8_i32 : i32
    %25 = tpu.iota {dimensions = array<i32: 0>} : vector<8x1xi32>
    %26 = vector.broadcast %24 : i32 to vector<8x1xi32>
    %27 = arith.addi %26, %25 : vector<8x1xi32>
    %c8_i32_8 = arith.constant 8 : i32
    %28 = vector.broadcast %c8_i32_8 : i32 to vector<8x1xi32>
    %29 = arith.cmpi slt, %27, %28 : vector<8x1xi32>
    %cst_9 = arith.constant 0.000000e+00 : f32
    %30 = vector.broadcast %cst_9 : f32 to vector<8x1xf32>
    %31 = arith.select %29, %23, %30 : vector<8x1xi1>, vector<8x1xf32>
    %c0_10 = arith.constant 0 : index
    %c0_11 = arith.constant 0 : index
    %32 = vector.load %arg3[%c0_10, %c0_11] : memref<8x1xf32, #tpu.memory_space<vmem>>, vector<8x1xf32>
    tpu.vector_store %arg3[%c0_10, %c0_11], %31 {strides = array<i32>} : memref<8x1xf32, #tpu.memory_space<vmem>>, vector<8x1xf32>,
    return
  }
  func.func @transform_0(%arg0: i32) -> (i32, i32) {
    %c0_i32 = arith.constant 0 : i32
    %c0_i32_0 = arith.constant 0 : i32
    return %arg0, %c0_i32 : i32, i32
  }
  func.func @transform_1(%arg0: i32) -> (i32, i32) {
    %c0_i32 = arith.constant 0 : i32
    %c0_i32_0 = arith.constant 0 : i32
    return %arg0, %c0_i32 : i32, i32
  }
  func.func @transform_2(%arg0: i32) -> (i32, i32) {
    %c0_i32 = arith.constant 0 : i32
    %c0_i32_0 = arith.constant 0 : i32
    return %arg0, %c0_i32 : i32, i32
  }
}

</mosaic_0001>

<llo_original>
// kernel: tpu_custom_call.1
$region0: #{tpu_custom_call.1}
  #allocation0 [shape = 'u32[]', space=smem, size = 0x4, offset = 0x4, fixed_abs, tag = 'smem constant byte address 0x4 - core index']
  #allocation1 [shape = 'u32[144,128]{1,0:T(1,128)}', space=vmem, size = 0x12000, scoped, tag = 'internal scratch']
  %s0 = inlined_call_operand.hbm [shape: f32[8,128], index: 0, kind: input, shape index: {}]
  %s1 = inlined_call_operand.hbm [shape: f32[8,128], index: 1, kind: input, shape index: {}]
  %s2 = inlined_call_operand.vmem [shape: f32[8,1], index: 2, kind: output, shape index: {}]
  %s3 = sld [smem:[#allocation0]]
  $region26: #{tpu_custom_call.1} parent=0
    _
  %s5 = ssub.s32 1, %s3
  %s6 = scalar_select 0, %s5, %s3
  $region1: #{tpu_custom_call.1} parent=0
    #allocation2 [shape = 'u8[4096]{0}', space=vmem, size = 0x1000, scoped, tag = 'input window, operand 0, single buffered']
    #allocation3 [shape = 's32[1]{0}', space=sflag, size = 0x4, scoped, tag = 'scoped memory for tpu_custom_call.1']
    #allocation4 [shape = 'u8[4096]{0}', space=vmem, size = 0x1000, scoped, tag = 'input window, operand 1, single buffered']
    #allocation5 [shape = 's32[1]{0}', space=sflag, size = 0x4, scoped, tag = 'scoped memory for tpu_custom_call.1']
    %7 = vsyncpa [#allocation3], 0
    %8 = vsyncpa [#allocation5], 0
    // Predicated region
    $region2: #{tpu_custom_call.1} parent=1 // pred_check
      _
    $region3: #{tpu_custom_call.1} parent=1 // pred_check_branch
      %10 = sbr.rel (0) target = $region5
    $region4: #{tpu_custom_call.1} parent=1 // pred_region
      %s12 = ssub.s32 128, 128
      %13 = vsyncadd [#allocation3], %s12
      %s15 = sshll.u32 [#allocation2], 4
      %s16 = int_to_ptr.vmem [resolvable:$true] %s15
      %18 = dma.hbm_to_vmem [thread:$0]  %s0, 128, %s16, [#allocation3]
    $region5: #{tpu_custom_call.1} parent=1 // pred_fallthru
      _
    // Predicated region
    $region6: #{tpu_custom_call.1} parent=1 // pred_check
      _
    $region7: #{tpu_custom_call.1} parent=1 // pred_check_branch
      %20 = sbr.rel (0) target = $region9
    $region8: #{tpu_custom_call.1} parent=1 // pred_region
      %s22 = ssub.s32 128, 128
      %23 = vsyncadd [#allocation5], %s22
      %s25 = sshll.u32 [#allocation4], 4
      %s26 = int_to_ptr.vmem [resolvable:$true] %s25
      %28 = dma.hbm_to_vmem [thread:$0]  %s1, 128, %s26, [#allocation5]
    $region9: #{tpu_custom_call.1} parent=1 // pred_fallthru
      _
    // Predicated region
    $region10: #{tpu_custom_call.1} parent=1 // pred_check
      _
    $region11: #{tpu_custom_call.1} parent=1 // pred_check_branch
      %30 = sbr.rel (0) target = $region13
    $region12: #{tpu_custom_call.1} parent=1 // pred_region
      %31 = dma.done [#allocation3], 128
    $region13: #{tpu_custom_call.1} parent=1 // pred_fallthru
      _
    // Predicated region
    $region14: #{tpu_custom_call.1} parent=1 // pred_check
      _
    $region15: #{tpu_custom_call.1} parent=1 // pred_check_branch
      %33 = sbr.rel (0) target = $region17
    $region16: #{tpu_custom_call.1} parent=1 // pred_region
      %34 = dma.done [#allocation5], 128
    $region17: #{tpu_custom_call.1} parent=1 // pred_fallthru
      _
    %v35 = vld [vmem:[#allocation2] sm:$0xff]
    %v36 = vld [vmem:[#allocation4] sm:$0xff]
    %37 = vmax.xlane.f32.xlu0 %v35
    %v38 = vpop.xlane.xlu0 %37
    %v39 = vsub.f32 %v35, %v38
    %v40 = vmul.f32 %v39, 1.442695
    %v41 = vpow.pop %v40
    %42 = vadd.xlane.f32.xlu0 %v41
    %v43 = vpop.xlane.xlu0 %42
    %v44 = vlog2.pop %v43
    %v45 = vmul.f32 %v44, 0.6931472
    %v46 = vadd.f32 %v45, %v38
    %47 = vadd.xlane.f32.xlu0 %v35
    %v48 = vpop.xlane.xlu0 %47
    %49 = vadd.xlane.f32.xlu0 %v36
    %v50 = vpop.xlane.xlu0 %49
    %v51 = vmul.f32 %v36, %v35
    %52 = vadd.xlane.f32.xlu0 %v51
    %v53 = vpop.xlane.xlu0 %52
    %v54 = vmul.f32 %v46, %v50
    %v55 = vsub.f32 %v54, %v53
    %v56 = vmul.f32 %v46, 128.0
    %v57 = vsub.f32 %v56, %v48
    %v58 = vrcp.pop %v57
    %v59 = vmul.f32 %v55, %v58
    %s60 = smul.u32 0, 8
    %v61 = vlaneseq
    %v62 = vshrl.u32 %v61, 7
    %v63 = vstv %s60
    %v64 = vadd.s32 %v63, %v62
    %vm65 = vcmp.lt.s32.totalorder %v64, 8
    %v66 = vsel %vm65, %v59, 0.0
    %vm67 = vcmask 7168
    %68 = vst.msk [vmem:[%s2] sm:$0xff] %vm67, %v66
    // Predicated region
    $region18: #{tpu_custom_call.1} parent=1 // pred_check
      _
    $region19: #{tpu_custom_call.1} parent=1 // pred_check_branch
      %70 = sbr.rel (0) target = $region21
    $region20: #{tpu_custom_call.1} parent=1 // pred_region
      _
    $region21: #{tpu_custom_call.1} parent=1 // pred_fallthru
      _
    // Predicated region
    $region22: #{tpu_custom_call.1} parent=1 // pred_check
      _
    $region23: #{tpu_custom_call.1} parent=1 // pred_check_branch
      %72 = sbr.rel (0) target = $region25
    $region24: #{tpu_custom_call.1} parent=1 // pred_region
      _
    $region25: #{tpu_custom_call.1} parent=1 // pred_fallthru
      _
    %73 = vsyncpa [#allocation3], 1
    %74 = vsyncpa [#allocation5], 1

</llo_original>
